<compile_context>
chip_gen: v7x
topology: tpu7x:2x2x1
jax: 0.10.0
libtpu: 0.0.40
codegen_flags: <defaults>
</compile_context>

<pallas_src>
import jax
import jax.numpy as jnp
from jax.experimental import pallas as pl
from jax.experimental.pallas import tpu as pltpu


def _round_up(x: int, m: int) -> int:
    return ((x + m - 1) // m) * m


# ----------------------------------------------------------------------------
# Pallas kernel: fused backsub (four tiny matmuls per row tile; MXU has slack)
# ----------------------------------------------------------------------------
def _backsub_kernel(lb_ref, ub_ref, wlb_ref, wub_ref, nlb_ref, nub_ref):
    lb = lb_ref[...]                         # (tm, K) f32
    ub = ub_ref[...]                         # (tm, K) f32
    wlb = wlb_ref[...]                       # (K, N)  f32, VMEM-resident
    wub = wub_ref[...]                       # (K, N)  f32, VMEM-resident

    lb_p = jnp.maximum(lb, 0.0)
    lb_n = jnp.maximum(-lb, 0.0)
    ub_p = jnp.maximum(ub, 0.0)
    ub_n = jnp.maximum(-ub, 0.0)

    nlb_ref[...] = (
        jnp.dot(lb_p, wlb, preferred_element_type=jnp.float32)
        - jnp.dot(lb_n, wub, preferred_element_type=jnp.float32)
    ).astype(nlb_ref.dtype)
    nub_ref[...] = (
        jnp.dot(ub_p, wub, preferred_element_type=jnp.float32)
        - jnp.dot(ub_n, wlb, preferred_element_type=jnp.float32)
    ).astype(nub_ref.dtype)


def _pick_tm(M: int) -> int:
    # >= 2 grid steps so ("parallel",) shards row tiles across both v7x TCs;
    # cap at 2048 rows to bound per-step DMA / VMEM; multiple of 8 sublanes.
    half = _round_up(max((M + 1) // 2, 8), 8)
    return min(2048, half)


@jax.jit
def backsub_pallas(lb, ub, w_bs_lb, w_bs_ub):
    """new_lb, new_ub = backsub(lb, ub, W_bs_lb, W_bs_ub), fused in one kernel."""
    M, K = lb.shape
    Kw, N = w_bs_lb.shape
    assert ub.shape == (M, K) and Kw == K and w_bs_ub.shape == (K, N)

    tm = _pick_tm(M)
    grid_m = pl.cdiv(M, tm)
    Mp = grid_m * tm
    if Mp != M:  # only pad rows when the tile doesn't divide M
        lb = jnp.pad(lb, ((0, Mp - M), (0, 0)))
        ub = jnp.pad(ub, ((0, Mp - M), (0, 0)))

    cost = pl.CostEstimate(
        flops=8 * Mp * K * N,                 # 4 matmuls of (Mp,K)@(K,N)
        transcendentals=0,
        bytes_accessed=4 * (2 * Mp * K + 2 * K * N + 2 * Mp * N))

    out_lb, out_ub = pl.pallas_call(
        _backsub_kernel,
        out_shape=(jax.ShapeDtypeStruct((Mp, N), lb.dtype),
                   jax.ShapeDtypeStruct((Mp, N), ub.dtype)),
        grid=(grid_m,),
        in_specs=[
            pl.BlockSpec((tm, K), lambda i: (i, 0)),      # lb row tile (full K)
            pl.BlockSpec((tm, K), lambda i: (i, 0)),      # ub row tile (full K)
            pl.BlockSpec((K, N), lambda i: (0, 0)),       # W_bs_lb (resident)
            pl.BlockSpec((K, N), lambda i: (0, 0)),       # W_bs_ub (resident)
        ],
        out_specs=(
            pl.BlockSpec((tm, N), lambda i: (i, 0)),
            pl.BlockSpec((tm, N), lambda i: (i, 0)),
        ),
        compiler_params=pltpu.CompilerParams(
            dimension_semantics=("parallel",)),
        cost_estimate=cost,
    )(lb, ub, w_bs_lb, w_bs_ub)

    if Mp != M:
        out_lb = out_lb[:M]
        out_ub = out_ub[:M]
    return out_lb, out_ub


# ----------------------------------------------------------------------------
# Plain-JAX setup glue (VerificationTransformer.__init__ / construct_backsub_matrix)
# ----------------------------------------------------------------------------
def construct_backsub_matrix(weight, bias):
    w_cat_b_lb = jnp.concatenate([weight, bias[:, None]], axis=1)
    w_cat_b_ub = w_cat_b_lb
    row = jnp.zeros((1, w_cat_b_lb.shape[1]), w_cat_b_lb.dtype).at[0, -1].set(1.0)
    w_bs_lb = jnp.concatenate([w_cat_b_lb, row], axis=0)
    w_bs_ub = w_bs_lb
    return w_bs_lb, w_bs_ub, w_cat_b_lb, w_cat_b_ub


def make_verification_transformer(true_label: int, num_classes: int = 10):
    """JAX port of VerificationTransformer.__init__ weight/bias construction."""
    w = jnp.zeros((num_classes - 1, num_classes), jnp.float32)
    w = w.at[:, true_label].set(1.0)
    other_cols = jnp.array([c for c in range(num_classes) if c != true_label])
    w = w.at[jnp.arange(num_classes - 1), other_cols].set(-1.0)
    bias = jnp.zeros((num_classes - 1,), jnp.float32)
    return w, bias


def get_initial_backsub_matrices(w_cat_b_lb, w_cat_b_ub):
    return w_cat_b_lb, w_cat_b_ub


# ----------------------------------------------------------------------------
# Reference (pure jnp) backsub for correctness checks
# ----------------------------------------------------------------------------
def backsub_ref(lb, ub, w_bs_lb, w_bs_ub):
    lb_p, lb_n = jnp.maximum(lb, 0.0), jnp.maximum(-lb, 0.0)
    ub_p, ub_n = jnp.maximum(ub, 0.0), jnp.maximum(-ub, 0.0)
    new_lb = lb_p @ w_bs_lb - lb_n @ w_bs_ub
    new_ub = ub_p @ w_bs_ub - ub_n @ w_bs_lb
    return new_lb, new_ub


if __name__ == "__main__":
    key = jax.random.PRNGKey(0)
    k1, k2, k3, k4 = jax.random.split(key, 4)

    # VerificationTransformer setup: 10 logits, true label 3.
    true_label = 3
    weight, bias = make_verification_transformer(true_label, num_classes=10)
    w_bs_lb, w_bs_ub, w_cb_lb, w_cb_ub = construct_backsub_matrix(weight, bias)
    # W_bs shape = (10, 11); symbolic bounds lb/ub: [M, 10]
    M, K = 256, w_bs_lb.shape[0]

    lb = jax.random.normal(k1, (M, K), jnp.float32)
    ub = lb + jnp.abs(jax.random.normal(k2, (M, K), jnp.float32))

    # 1) Module's actual backsub matrices (W_bs_lb == W_bs_ub).
    new_lb, new_ub = backsub_pallas(lb, ub, w_bs_lb, w_bs_ub)
    jax.block_until_ready((new_lb, new_ub))
    ref_lb, ref_ub = backsub_ref(lb, ub, w_bs_lb, w_bs_ub)
    assert jnp.allclose(new_lb, ref_lb, atol=1e-5, rtol=1e-5)
    assert jnp.allclose(new_ub, ref_ub, atol=1e-5, rtol=1e-5)

    # 2) Generic path with distinct lb/ub matrices (exercises all four matmuls).
    w_a = jax.random.normal(k3, w_bs_lb.shape, jnp.float32)
    w_b = jax.random.normal(k4, w_bs_lb.shape, jnp.float32)
    g_lb, g_ub = backsub_pallas(lb, ub, w_a, w_b)
    jax.block_until_ready((g_lb, g_ub))
    r_lb, r_ub = backsub_ref(lb, ub, w_a, w_b)
    assert jnp.allclose(g_lb, r_lb, atol=1e-4, rtol=1e-5)
    assert jnp.allclose(g_ub, r_ub, atol=1e-4, rtol=1e-5)

    print("KERNEL_OK")
</pallas_src>

<mosaic_0001>
module attributes {stable_mosaic.version = 11 : i64} {
  func.func @_backsub_kernel(%arg0: i32, %arg1: memref<128x10xf32, #tpu.memory_space<vmem>>, %arg2: memref<128x10xf32, #tpu.memory_space<vmem>>, %arg3: memref<10x11xf32, #tpu.memory_space<vmem>>, %arg4: memref<10x11xf32, #tpu.memory_space<vmem>>, %arg5: memref<128x11xf32, #tpu.memory_space<vmem>>, %arg6: memref<128x11xf32, #tpu.memory_space<vmem>>) attributes {dimension_semantics = [#tpu.dimension_semantics<parallel>], iteration_bounds = array<i64: 2>, scalar_prefetch = 0 : i64, scratch_operands = 0 : i64, tpu.core_type = #tpu.core_type<tc>, window_params = [{transform_indices = @transform_0, window_bounds = array<i64: 128, 10>}, {transform_indices = @transform_1, window_bounds = array<i64: 128, 10>}, {pipeline_mode = #tpu.pipeline_mode<synchronous>, transform_indices = @transform_2, window_bounds = array<i64: 10, 11>}, {pipeline_mode = #tpu.pipeline_mode<synchronous>, transform_indices = @transform_3, window_bounds = array<i64: 10, 11>}, {transform_indices = @transform_4, window_bounds = array<i64: 128, 11>}, {transform_indices = @transform_5, window_bounds = array<i64: 128, 11>}]} {
    %c0 = arith.constant 0 : index
    %c0_0 = arith.constant 0 : index
    %0 = vector.load %arg1[%c0, %c0_0] : memref<128x10xf32, #tpu.memory_space<vmem>>, vector<128x10xf32>
    %c0_1 = arith.constant 0 : index
    %c0_2 = arith.constant 0 : index
    %1 = vector.load %arg2[%c0_1, %c0_2] : memref<128x10xf32, #tpu.memory_space<vmem>>, vector<128x10xf32>
    %c0_3 = arith.constant 0 : index
    %c0_4 = arith.constant 0 : index
    %2 = vector.load %arg3[%c0_3, %c0_4] : memref<10x11xf32, #tpu.memory_space<vmem>>, vector<10x11xf32>
    %c0_5 = arith.constant 0 : index
    %c0_6 = arith.constant 0 : index
    %3 = vector.load %arg4[%c0_5, %c0_6] : memref<10x11xf32, #tpu.memory_space<vmem>>, vector<10x11xf32>
    %cst = arith.constant 0.000000e+00 : f32
    %4 = vector.broadcast %cst : f32 to vector<128x10xf32>
    %5 = arith.maximumf %0, %4 : vector<128x10xf32>
    %cst_7 = arith.constant 0.000000e+00 : f32
    %6 = vector.broadcast %cst_7 : f32 to vector<128x10xf32>
    %7 = arith.subf %6, %0 : vector<128x10xf32>
    %cst_8 = arith.constant 0.000000e+00 : f32
    %8 = vector.broadcast %cst_8 : f32 to vector<128x10xf32>
    %9 = arith.maximumf %7, %8 : vector<128x10xf32>
    %cst_9 = arith.constant 0.000000e+00 : f32
    %10 = vector.broadcast %cst_9 : f32 to vector<128x10xf32>
    %11 = arith.maximumf %1, %10 : vector<128x10xf32>
    %cst_10 = arith.constant 0.000000e+00 : f32
    %12 = vector.broadcast %cst_10 : f32 to vector<128x10xf32>
    %13 = arith.subf %12, %1 : vector<128x10xf32>
    %cst_11 = arith.constant 0.000000e+00 : f32
    %14 = vector.broadcast %cst_11 : f32 to vector<128x10xf32>
    %15 = arith.maximumf %13, %14 : vector<128x10xf32>
    %cst_12 = arith.constant dense<0.000000e+00> : vector<128x11xf32>
    %16 = tpu.matmul %5, %2, %cst_12 {dimension_numbers = #tpu.dot_dimension_numbers<[1], [0], [0], [1], [0, 0, 1, 1], [], []>} : vector<128x10xf32>, vector<10x11xf32>, vector<128x11xf32> -> vector<128x11xf32>
    %cst_13 = arith.constant dense<0.000000e+00> : vector<128x11xf32>
    %17 = tpu.matmul %9, %3, %cst_13 {dimension_numbers = #tpu.dot_dimension_numbers<[1], [0], [0], [1], [0, 0, 1, 1], [], []>} : vector<128x10xf32>, vector<10x11xf32>, vector<128x11xf32> -> vector<128x11xf32>
    %18 = arith.subf %16, %17 : vector<128x11xf32>
    %c0_14 = arith.constant 0 : index
    %c0_15 = arith.constant 0 : index
    %19 = vector.load %arg5[%c0_14, %c0_15] : memref<128x11xf32, #tpu.memory_space<vmem>>, vector<128x11xf32>
    tpu.vector_store %arg5[%c0_14, %c0_15], %18 {strides = array<i32>} : memref<128x11xf32, #tpu.memory_space<vmem>>, vector<128x11xf32>,
    %cst_16 = arith.constant dense<0.000000e+00> : vector<128x11xf32>
    %20 = tpu.matmul %11, %3, %cst_16 {dimension_numbers = #tpu.dot_dimension_numbers<[1], [0], [0], [1], [0, 0, 1, 1], [], []>} : vector<128x10xf32>, vector<10x11xf32>, vector<128x11xf32> -> vector<128x11xf32>
    %cst_17 = arith.constant dense<0.000000e+00> : vector<128x11xf32>
    %21 = tpu.matmul %15, %2, %cst_17 {dimension_numbers = #tpu.dot_dimension_numbers<[1], [0], [0], [1], [0, 0, 1, 1], [], []>} : vector<128x10xf32>, vector<10x11xf32>, vector<128x11xf32> -> vector<128x11xf32>
    %22 = arith.subf %20, %21 : vector<128x11xf32>
    %c0_18 = arith.constant 0 : index
    %c0_19 = arith.constant 0 : index
    %23 = vector.load %arg6[%c0_18, %c0_19] : memref<128x11xf32, #tpu.memory_space<vmem>>, vector<128x11xf32>
    tpu.vector_store %arg6[%c0_18, %c0_19], %22 {strides = array<i32>} : memref<128x11xf32, #tpu.memory_space<vmem>>, vector<128x11xf32>,
    return
  }
  func.func @transform_0(%arg0: i32) -> (i32, i32) {
    %c0_i32 = arith.constant 0 : i32
    %c0_i32_0 = arith.constant 0 : i32
    return %arg0, %c0_i32 : i32, i32
  }
  func.func @transform_1(%arg0: i32) -> (i32, i32) {
    %c0_i32 = arith.constant 0 : i32
    %c0_i32_0 = arith.constant 0 : i32
    return %arg0, %c0_i32 : i32, i32
  }
  func.func @transform_2(%arg0: i32) -> (i32, i32) {
    %c0_i32 = arith.constant 0 : i32
    %c0_i32_0 = arith.constant 0 : i32
    %c0_i32_1 = arith.constant 0 : i32
    return %c0_i32, %c0_i32_0 : i32, i32
  }
  func.func @transform_3(%arg0: i32) -> (i32, i32) {
    %c0_i32 = arith.constant 0 : i32
    %c0_i32_0 = arith.constant 0 : i32
    %c0_i32_1 = arith.constant 0 : i32
    return %c0_i32, %c0_i32_0 : i32, i32
  }
  func.func @transform_4(%arg0: i32) -> (i32, i32) {
    %c0_i32 = arith.constant 0 : i32
    %c0_i32_0 = arith.constant 0 : i32
    return %arg0, %c0_i32 : i32, i32
  }
  func.func @transform_5(%arg0: i32) -> (i32, i32) {
    %c0_i32 = arith.constant 0 : i32
    %c0_i32_0 = arith.constant 0 : i32
    return %arg0, %c0_i32 : i32, i32
  }
}

</mosaic_0001>

<llo_original>
// kernel: backsub_pallas.1
$region0: #{backsub_pallas.1}
  #allocation0 [shape = 'u32[]', space=smem, size = 0x4, offset = 0x4, fixed_abs, tag = 'smem constant byte address 0x4 - core index']
  #allocation1 [shape = 'u32[144,128]{1,0:T(1,128)}', space=vmem, size = 0x12000, scoped, tag = 'internal scratch']
  %s0 = inlined_call_operand.vmem [shape: f32[256,10], index: 0, kind: input, shape index: {}]
  %s1 = inlined_call_operand.vmem [shape: f32[256,10], index: 1, kind: input, shape index: {}]
  %s2 = inlined_call_operand.vmem [shape: f32[10,11], index: 2, kind: input, shape index: {}]
  %s3 = inlined_call_operand.vmem [shape: f32[10,11], index: 3, kind: input, shape index: {}]
  %s4 = inlined_call_operand.vmem [shape: f32[256,11], index: 4, kind: output, shape index: {0}]
  %s5 = inlined_call_operand.vmem [shape: f32[256,11], index: 5, kind: output, shape index: {1}]
  %6 = xla_tuple %s4, %s5
  %s7 = sld [smem:[#allocation0]]
  $region57: #{backsub_pallas.1} parent=0
    _
  %s9 = ssub.s32 1, %s7
  %s10 = scalar_select 0, %s9, %s7
  loop: start=0, step=1, limit=4
  $region2: #{backsub_pallas.1} parent=0 // loop_pre_header
    _
  $region3: #{backsub_pallas.1} parent=0 // loop_header
    %s12 = sphi 0, %s16
    %p13 = scmp.ge.s32.totalorder %s12, 4
    %s22 = sphi 0, %s24
    %s25 = sphi 0, %s22
    %s26 = sphi 0, %s25
    %s42 = sphi 0, %s26
    %s48 = sphi 0, %s50
    %s51 = sphi 0, %s48
    %s52 = sphi 0, %s51
    %s68 = sphi 0, %s52
    %s72 = sphi 0, %s72
    %s74 = sphi 0, %s72
    %s75 = sphi 0, %s74
    %s89 = sphi 0, %s75
    %s93 = sphi 0, %s93
    %s95 = sphi 0, %s93
    %s96 = sphi 0, %s95
    %s110 = sphi 0, %s96
    %s116 = sphi 0, %s118
    %s119 = sphi 0, %s116
    %s120 = sphi 0, %s119
    %s136 = sphi 0, %s120
    %s142 = sphi 0, %s144
    %s145 = sphi 0, %s142
    %s146 = sphi 0, %s145
    %s162 = sphi 0, %s146
  $region4: #{backsub_pallas.1} parent=0 // loop_header_branch
    %15 = sbr.rel (%p13) target = $region8
  $region5: #{backsub_pallas.1} parent=0 // loop_body
    %s17 = ssub.s32 %s12, 1
    %s18 = ssub.s32 %s12, 2
    %s19 = sadd.s32 %s12, 1
    %s20 = ssub.s32 %s12, %s19
    %p21 = scmp.eq.s32.totalorder %s20, 0
    %s23 = sadd.s32 %s22, 1
    %s24 = scalar_select %p21, %s22, %s23
    %p27 = pneg %p21
    %p28 = scmp.eq.s32.totalorder %s12, 1
    %p29 = por %p27, %p28
    %p30 = scmp.ne.s32.totalorder %s22, %s25
    %p31 = scmp.eq.s32.totalorder %s12, 0
    %p32 = por %p30, %p31
    %p33 = scmp.ne.s32.totalorder %s22, %s25
    %p34 = scmp.eq.s32.totalorder %s17, 1
    %p35 = por %p33, %p34
    %p36 = scmp.ne.s32.totalorder %s25, %s26
    %p37 = scmp.eq.s32.totalorder %s17, 0
    %p38 = por %p36, %p37
    %p39 = scmp.ne.s32.totalorder %s25, %s26
    %p40 = scmp.eq.s32.totalorder %s18, 1
    %p41 = por %p39, %p40
    %p43 = scmp.ne.s32.totalorder %s26, %s42
    %p44 = scmp.eq.s32.totalorder %s18, 0
    %p45 = por %p43, %p44
    %s46 = ssub.s32 %s12, %s19
    %p47 = scmp.eq.s32.totalorder %s46, 0
    %s49 = sadd.s32 %s48, 1
    %s50 = scalar_select %p47, %s48, %s49
    %p53 = pneg %p47
    %p54 = scmp.eq.s32.totalorder %s12, 1
    %p55 = por %p53, %p54
    %p56 = scmp.ne.s32.totalorder %s48, %s51
    %p57 = scmp.eq.s32.totalorder %s12, 0
    %p58 = por %p56, %p57
    %p59 = scmp.ne.s32.totalorder %s48, %s51
    %p60 = scmp.eq.s32.totalorder %s17, 1
    %p61 = por %p59, %p60
    %p62 = scmp.ne.s32.totalorder %s51, %s52
    %p63 = scmp.eq.s32.totalorder %s17, 0
    %p64 = por %p62, %p63
    %p65 = scmp.ne.s32.totalorder %s51, %s52
    %p66 = scmp.eq.s32.totalorder %s18, 1
    %p67 = por %p65, %p66
    %p69 = scmp.ne.s32.totalorder %s52, %s68
    %p70 = scmp.eq.s32.totalorder %s18, 0
    %p71 = por %p69, %p70
    %s73 = sadd.s32 %s72, 1
    %p76 = scmp.eq.s32.totalorder %s12, 1
    %p77 = scmp.ne.s32.totalorder %s72, %s74
    %p78 = scmp.eq.s32.totalorder %s12, 0
    %p79 = por %p77, %p78
    %p80 = scmp.ne.s32.totalorder %s72, %s74
    %p81 = scmp.eq.s32.totalorder %s17, 1
    %p82 = por %p80, %p81
    %p83 = scmp.ne.s32.totalorder %s74, %s75
    %p84 = scmp.eq.s32.totalorder %s17, 0
    %p85 = por %p83, %p84
    %p86 = scmp.ne.s32.totalorder %s74, %s75
    %p87 = scmp.eq.s32.totalorder %s18, 1
    %p88 = por %p86, %p87
    %p90 = scmp.ne.s32.totalorder %s75, %s89
    %p91 = scmp.eq.s32.totalorder %s18, 0
    %p92 = por %p90, %p91
    %s94 = sadd.s32 %s93, 1
    %p97 = scmp.eq.s32.totalorder %s12, 1
    %p98 = scmp.ne.s32.totalorder %s93, %s95
    %p99 = scmp.eq.s32.totalorder %s12, 0
    %p100 = por %p98, %p99
    %p101 = scmp.ne.s32.totalorder %s93, %s95
    %p102 = scmp.eq.s32.totalorder %s17, 1
    %p103 = por %p101, %p102
    %p104 = scmp.ne.s32.totalorder %s95, %s96
    %p105 = scmp.eq.s32.totalorder %s17, 0
    %p106 = por %p104, %p105
    %p107 = scmp.ne.s32.totalorder %s95, %s96
    %p108 = scmp.eq.s32.totalorder %s18, 1
    %p109 = por %p107, %p108
    %p111 = scmp.ne.s32.totalorder %s96, %s110
    %p112 = scmp.eq.s32.totalorder %s18, 0
    %p113 = por %p111, %p112
    %s114 = ssub.s32 %s12, %s19
    %p115 = scmp.eq.s32.totalorder %s114, 0
    %s117 = sadd.s32 %s116, 1
    %s118 = scalar_select %p115, %s116, %s117
    %p121 = pneg %p115
    %p122 = scmp.eq.s32.totalorder %s12, 1
    %p123 = por %p121, %p122
    %p124 = scmp.ne.s32.totalorder %s116, %s119
    %p125 = scmp.eq.s32.totalorder %s12, 0
    %p126 = por %p124, %p125
    %p127 = scmp.ne.s32.totalorder %s116, %s119
    %p128 = scmp.eq.s32.totalorder %s17, 1
    %p129 = por %p127, %p128
    %p130 = scmp.ne.s32.totalorder %s119, %s120
    %p131 = scmp.eq.s32.totalorder %s17, 0
    %p132 = por %p130, %p131
    %p133 = scmp.ne.s32.totalorder %s119, %s120
    %p134 = scmp.eq.s32.totalorder %s18, 1
    %p135 = por %p133, %p134
    %p137 = scmp.ne.s32.totalorder %s120, %s136
    %p138 = scmp.eq.s32.totalorder %s18, 0
    %p139 = por %p137, %p138
    %s140 = ssub.s32 %s12, %s19
    %p141 = scmp.eq.s32.totalorder %s140, 0
    %s143 = sadd.s32 %s142, 1
    %s144 = scalar_select %p141, %s142, %s143
    %p147 = pneg %p141
    %p148 = scmp.eq.s32.totalorder %s12, 1
    %p149 = por %p147, %p148
    %p150 = scmp.ne.s32.totalorder %s142, %s145
    %p151 = scmp.eq.s32.totalorder %s12, 0
    %p152 = por %p150, %p151
    %p153 = scmp.ne.s32.totalorder %s142, %s145
    %p154 = scmp.eq.s32.totalorder %s17, 1
    %p155 = por %p153, %p154
    %p156 = scmp.ne.s32.totalorder %s145, %s146
    %p157 = scmp.eq.s32.totalorder %s17, 0
    %p158 = por %p156, %p157
    %p159 = scmp.ne.s32.totalorder %s145, %s146
    %p160 = scmp.eq.s32.totalorder %s18, 1
    %p161 = por %p159, %p160
    %p163 = scmp.ne.s32.totalorder %s146, %s162
    %p164 = scmp.eq.s32.totalorder %s18, 0
    %p165 = por %p163, %p164
    %p166 = scmp.le.s32.totalorder 1, %s12
    %p167 = scmp.lt.s32.totalorder %s12, 3
    %p168 = pnand %p166, %p167
    %p169 = pneg %p168
    // Predicated region
    $region9: #{backsub_pallas.1} parent=5 // pred_check
      _
    $region10: #{backsub_pallas.1} parent=5 // pred_check_branch
      %171 = sbr.rel (%p168) target = $region12
    $region11: #{backsub_pallas.1} parent=5 // pred_region
      %s172 = ssub.s32 %s12, 1
      // Predicated region
      $region13: #{backsub_pallas.1} parent=11 // pred_check
        %p173 = pneg %p85
      $region14: #{backsub_pallas.1} parent=11 // pred_check_branch
        %175 = sbr.rel (%p173) target = $region16
      $region15: #{backsub_pallas.1} parent=11 // pred_region
        _
      $region16: #{backsub_pallas.1} parent=11 // pred_fallthru
        _
      // Predicated region
      $region17: #{backsub_pallas.1} parent=11 // pred_check
        %p176 = pneg %p106
      $region18: #{backsub_pallas.1} parent=11 // pred_check_branch
        %178 = sbr.rel (%p176) target = $region20
      $region19: #{backsub_pallas.1} parent=11 // pred_region
        _
      $region20: #{backsub_pallas.1} parent=11 // pred_fallthru
        _
    $region12: #{backsub_pallas.1} parent=5 // pred_fallthru
      _
    %p179 = scmp.lt.s32.totalorder %s12, 2
    // Predicated region
    $region21: #{backsub_pallas.1} parent=5 // pred_check
      %p180 = pneg %p179
    $region22: #{backsub_pallas.1} parent=5 // pred_check_branch
      %182 = sbr.rel (%p180) target = $region24
    $region23: #{backsub_pallas.1} parent=5 // pred_region
      // Predicated region
      $region25: #{backsub_pallas.1} parent=23 // pred_check
        %p183 = pneg %p32
      $region26: #{backsub_pallas.1} parent=23 // pred_check_branch
        %185 = sbr.rel (%p183) target = $region28
      $region27: #{backsub_pallas.1} parent=23 // pred_region
        %s186 = smul.u32 16, %s12
        %p187 = scmp.lt.s32.totalorder %s186, 31
        %s188 = scalar_select %p187, %s186, 31
        %s189 = smul.addr %s188, 8
        %s190 = scalar_lea.vmem %s0, %s189
        %s191 = smul.u32 16, %s12
      $region28: #{backsub_pallas.1} parent=23 // pred_fallthru
        _
      // Predicated region
      $region29: #{backsub_pallas.1} parent=23 // pred_check
        %p192 = pneg %p58
      $region30: #{backsub_pallas.1} parent=23 // pred_check_branch
        %194 = sbr.rel (%p192) target = $region32
      $region31: #{backsub_pallas.1} parent=23 // pred_region
        %s195 = smul.u32 16, %s12
        %p196 = scmp.lt.s32.totalorder %s195, 31
        %s197 = scalar_select %p196, %s195, 31
        %s198 = smul.addr %s197, 8
        %s199 = scalar_lea.vmem %s1, %s198
        %s200 = smul.u32 16, %s12
      $region32: #{backsub_pallas.1} parent=23 // pred_fallthru
        _
    $region24: #{backsub_pallas.1} parent=5 // pred_fallthru
      _
    %p201 = scmp.le.s32.totalorder 1, %s12
    %p202 = scmp.lt.s32.totalorder %s12, 3
    %p203 = pnand %p201, %p202
    %p204 = pneg %p203
    // Predicated region
    $region33: #{backsub_pallas.1} parent=5 // pred_check
      _
    $region34: #{backsub_pallas.1} parent=5 // pred_check_branch
      %206 = sbr.rel (%p203) target = $region36
    $region35: #{backsub_pallas.1} parent=5 // pred_region
      %s207 = ssub.s32 %s12, 1
      %s208 = smul.u32 16, %s17
      %p209 = scmp.lt.s32.totalorder %s208, 31
      %s210 = scalar_select %p209, %s208, 31
      %s211 = smul.addr %s210, 8
      %s212 = scalar_lea.vmem %s0, %s211
      %p213 = pneg %p38
      %p214 = pneg %p35
      %s215 = smul.u32 16, %s17
      %p216 = scmp.lt.s32.totalorder %s215, 31
      %s217 = scalar_select %p216, %s215, 31
      %s218 = smul.addr %s217, 8
      %s219 = scalar_lea.vmem %s1, %s218
      %p220 = pneg %p64
      %p221 = pneg %p61
      %p222 = pneg %p85
      %p223 = pneg %p82
      %p224 = pneg %p106
      %p225 = pneg %p103
      %p226 = pneg %p132
      %p227 = pneg %p129
      %s228 = smul.u32 16, %s17
      %p229 = scmp.lt.s32.totalorder %s228, 31
      %s230 = scalar_select %p229, %s228, 31
      %s231 = smul.addr %s230, 8
      %s232 = scalar_lea.vmem %s4, %s231
      %p233 = pneg %p158
      %p234 = pneg %p155
      %s235 = smul.u32 16, %s17
      %p236 = scmp.lt.s32.totalorder %s235, 31
      %s237 = scalar_select %p236, %s235, 31
      %s238 = smul.addr %s237, 8
      %s239 = scalar_lea.vmem %s5, %s238
      %s240 = smul.u32 16, %s17
      %p241 = scmp.lt.s32.totalorder %s240, 31
      %s242 = scalar_select %p241, %s240, 31
      %s243 = smul.addr %s242, 8
      %s244 = scalar_lea.vmem %s0, %s243
      %s245 = smul.u32 16, %s17
      %s246 = smul.u32 16, %s17
      %p247 = scmp.lt.s32.totalorder %s246, 31
      %s248 = scalar_select %p247, %s246, 31
      %s249 = smul.addr %s248, 8
      %s250 = scalar_lea.vmem %s1, %s249
      %s251 = smul.u32 16, %s17
      %s252 = smul.u32 16, %s17
      %p253 = scmp.lt.s32.totalorder %s252, 31
      %s254 = scalar_select %p253, %s252, 31
      %s255 = smul.addr %s254, 8
      %s256 = scalar_lea.vmem %s4, %s255
      %s257 = smul.u32 16, %s17
      %s258 = smul.u32 16, %s17
      %p259 = scmp.lt.s32.totalorder %s258, 31
      %s260 = scalar_select %p259, %s258, 31
      %s261 = smul.addr %s260, 8
      %s262 = scalar_lea.vmem %s5, %s261
      %s263 = smul.u32 16, %s17
      %v264 = vld [vmem:[%s244] sm:$0xff]
      %v265 = vld [vmem:[%s244 + $0x8] sm:$0xff]
      %v266 = vld [vmem:[%s244 + $0x10] sm:$0xff]
      %v267 = vld [vmem:[%s244 + $0x18] sm:$0xff]
      %v268 = vld [vmem:[%s244 + $0x20] sm:$0xff]
      %v269 = vld [vmem:[%s244 + $0x28] sm:$0xff]
      %v270 = vld [vmem:[%s244 + $0x30] sm:$0xff]
      %v271 = vld [vmem:[%s244 + $0x38] sm:$0xff]
      %v272 = vld [vmem:[%s244 + $0x40] sm:$0xff]
      %v273 = vld [vmem:[%s244 + $0x48] sm:$0xff]
      %v274 = vld [vmem:[%s244 + $0x50] sm:$0xff]
      %v275 = vld [vmem:[%s244 + $0x58] sm:$0xff]
      %v276 = vld [vmem:[%s244 + $0x60] sm:$0xff]
      %v277 = vld [vmem:[%s244 + $0x68] sm:$0xff]
      %v278 = vld [vmem:[%s244 + $0x70] sm:$0xff]
      %v279 = vld [vmem:[%s244 + $0x78] sm:$0xff]
      %v280 = vld [vmem:[%s250] sm:$0xff]
      %v281 = vld [vmem:[%s250 + $0x8] sm:$0xff]
      %v282 = vld [vmem:[%s250 + $0x10] sm:$0xff]
      %v283 = vld [vmem:[%s250 + $0x18] sm:$0xff]
      %v284 = vld [vmem:[%s250 + $0x20] sm:$0xff]
      %v285 = vld [vmem:[%s250 + $0x28] sm:$0xff]
      %v286 = vld [vmem:[%s250 + $0x30] sm:$0xff]
      %v287 = vld [vmem:[%s250 + $0x38] sm:$0xff]
      %v288 = vld [vmem:[%s250 + $0x40] sm:$0xff]
      %v289 = vld [vmem:[%s250 + $0x48] sm:$0xff]
      %v290 = vld [vmem:[%s250 + $0x50] sm:$0xff]
      %v291 = vld [vmem:[%s250 + $0x58] sm:$0xff]
      %v292 = vld [vmem:[%s250 + $0x60] sm:$0xff]
      %v293 = vld [vmem:[%s250 + $0x68] sm:$0xff]
      %v294 = vld [vmem:[%s250 + $0x70] sm:$0xff]
      %v295 = vld [vmem:[%s250 + $0x78] sm:$0xff]
      %v296 = vld [vmem:[%s2] sm:$0xff]
      %v297 = vld [vmem:[%s2 + $0x8] sm:$0x3]
      %v298 = vld [vmem:[%s3] sm:$0xff]
      %v299 = vld [vmem:[%s3 + $0x8] sm:$0x3]
      %v300 = vmax.f32 %v264, 0.0
      %v301 = vmax.f32 %v265, 0.0
      %v302 = vmax.f32 %v266, 0.0
      %v303 = vmax.f32 %v267, 0.0
      %v304 = vmax.f32 %v268, 0.0
      %v305 = vmax.f32 %v269, 0.0
      %v306 = vmax.f32 %v270, 0.0
      %v307 = vmax.f32 %v271, 0.0
      %v308 = vmax.f32 %v272, 0.0
      %v309 = vmax.f32 %v273, 0.0
      %v310 = vmax.f32 %v274, 0.0
      %v311 = vmax.f32 %v275, 0.0
      %v312 = vmax.f32 %v276, 0.0
      %v313 = vmax.f32 %v277, 0.0
      %v314 = vmax.f32 %v278, 0.0
      %v315 = vmax.f32 %v279, 0.0
      %v316 = vsub.f32 0.0, %v264
      %v317 = vsub.f32 0.0, %v265
      %v318 = vsub.f32 0.0, %v266
      %v319 = vsub.f32 0.0, %v267
      %v320 = vsub.f32 0.0, %v268
      %v321 = vsub.f32 0.0, %v269
      %v322 = vsub.f32 0.0, %v270
      %v323 = vsub.f32 0.0, %v271
      %v324 = vsub.f32 0.0, %v272
      %v325 = vsub.f32 0.0, %v273
      %v326 = vsub.f32 0.0, %v274
      %v327 = vsub.f32 0.0, %v275
      %v328 = vsub.f32 0.0, %v276
      %v329 = vsub.f32 0.0, %v277
      %v330 = vsub.f32 0.0, %v278
      %v331 = vsub.f32 0.0, %v279
      %v332 = vmax.f32 %v316, 0.0
      %v333 = vmax.f32 %v317, 0.0
      %v334 = vmax.f32 %v318, 0.0
      %v335 = vmax.f32 %v319, 0.0
      %v336 = vmax.f32 %v320, 0.0
      %v337 = vmax.f32 %v321, 0.0
      %v338 = vmax.f32 %v322, 0.0
      %v339 = vmax.f32 %v323, 0.0
      %v340 = vmax.f32 %v324, 0.0
      %v341 = vmax.f32 %v325, 0.0
      %v342 = vmax.f32 %v326, 0.0
      %v343 = vmax.f32 %v327, 0.0
      %v344 = vmax.f32 %v328, 0.0
      %v345 = vmax.f32 %v329, 0.0
      %v346 = vmax.f32 %v330, 0.0
      %v347 = vmax.f32 %v331, 0.0
      %v348 = vmax.f32 %v280, 0.0
      %v349 = vmax.f32 %v281, 0.0
      %v350 = vmax.f32 %v282, 0.0
      %v351 = vmax.f32 %v283, 0.0
      %v352 = vmax.f32 %v284, 0.0
      %v353 = vmax.f32 %v285, 0.0
      %v354 = vmax.f32 %v286, 0.0
      %v355 = vmax.f32 %v287, 0.0
      %v356 = vmax.f32 %v288, 0.0
      %v357 = vmax.f32 %v289, 0.0
      %v358 = vmax.f32 %v290, 0.0
      %v359 = vmax.f32 %v291, 0.0
      %v360 = vmax.f32 %v292, 0.0
      %v361 = vmax.f32 %v293, 0.0
      %v362 = vmax.f32 %v294, 0.0
      %v363 = vmax.f32 %v295, 0.0
      %v364 = vsub.f32 0.0, %v280
      %v365 = vsub.f32 0.0, %v281
      %v366 = vsub.f32 0.0, %v282
      %v367 = vsub.f32 0.0, %v283
      %v368 = vsub.f32 0.0, %v284
      %v369 = vsub.f32 0.0, %v285
      %v370 = vsub.f32 0.0, %v286
      %v371 = vsub.f32 0.0, %v287
      %v372 = vsub.f32 0.0, %v288
      %v373 = vsub.f32 0.0, %v289
      %v374 = vsub.f32 0.0, %v290
      %v375 = vsub.f32 0.0, %v291
      %v376 = vsub.f32 0.0, %v292
      %v377 = vsub.f32 0.0, %v293
      %v378 = vsub.f32 0.0, %v294
      %v379 = vsub.f32 0.0, %v295
      %v380 = vmax.f32 %v364, 0.0
      %v381 = vmax.f32 %v365, 0.0
      %v382 = vmax.f32 %v366, 0.0
      %v383 = vmax.f32 %v367, 0.0
      %v384 = vmax.f32 %v368, 0.0
      %v385 = vmax.f32 %v369, 0.0
      %v386 = vmax.f32 %v370, 0.0
      %v387 = vmax.f32 %v371, 0.0
      %v388 = vmax.f32 %v372, 0.0
      %v389 = vmax.f32 %v373, 0.0
      %v390 = vmax.f32 %v374, 0.0
      %v391 = vmax.f32 %v375, 0.0
      %v392 = vmax.f32 %v376, 0.0
      %v393 = vmax.f32 %v377, 0.0
      %v394 = vmax.f32 %v378, 0.0
      %v395 = vmax.f32 %v379, 0.0
      %vm396 = vcmask 80896
      %v398 = vsel %vm396, %v300, 0
      %v401 = vsel %vm396, %v301, 0
      %v404 = vsel %vm396, %v302, 0
      %v407 = vsel %vm396, %v303, 0
      %v410 = vsel %vm396, %v304, 0
      %v413 = vsel %vm396, %v305, 0
      %v416 = vsel %vm396, %v306, 0
      %v419 = vsel %vm396, %v307, 0
      %v422 = vsel %vm396, %v308, 0
      %v425 = vsel %vm396, %v309, 0
      %v428 = vsel %vm396, %v310, 0
      %v431 = vsel %vm396, %v311, 0
      %v434 = vsel %vm396, %v312, 0
      %v437 = vsel %vm396, %v313, 0
      %v440 = vsel %vm396, %v314, 0
      %v443 = vsel %vm396, %v315, 0
      %vm445 = vcmask 1041408
      %v447 = vsel %vm445, %v297, 0
      %449 = vmatprep.subr.mxu0 0.0
      %450 = vmatpush1.msra.mxu0 %v296
      %451 = vmatprep.subr.mxu0 0.0
      %452 = vmatpush1.msra.mxu0 %v447
      %453 = vmatprep.subr.mxu0 0.0
      %454 = vmatpush1.msra.mxu0 0.0
      %455 = vmatprep.subr.mxu0 0.0
      %456 = vmatpush1.msra.mxu0 0.0
      %457 = vmatprep.subr.mxu0 0.0
      %458 = vmatpush1.msra.mxu0 0.0
      %459 = vmatprep.subr.mxu0 0.0
      %460 = vmatpush1.msra.mxu0 0.0
      %461 = vmatprep.subr.mxu0 0.0
      %462 = vmatpush1.msra.mxu0 0.0
      %463 = vmatprep.subr.mxu0 0.0
      %464 = vmatpush1.msra.mxu0 0.0
      %465 = vmatprep.subr.mxu0 0.0
      %466 = vmatpush1.msra.mxu0 0.0
      %467 = vmatprep.subr.mxu0 0.0
      %468 = vmatpush1.msra.mxu0 0.0
      %469 = vmatprep.subr.mxu0 0.0
      %470 = vmatpush1.msra.mxu0 0.0
      %471 = vmatprep.subr.mxu0 0.0
      %472 = vmatpush1.msra.mxu0 0.0
      %473 = vmatprep.subr.mxu0 0.0
      %474 = vmatpush1.msra.mxu0 0.0
      %475 = vmatprep.subr.mxu0 0.0
      %476 = vmatpush1.msra.mxu0 0.0
      %477 = vmatprep.subr.mxu0 0.0
      %478 = vmatpush1.msra.mxu0 0.0
      %479 = vmatprep.subr.mxu0 0.0
      %480 = vmatpush1.msra.mxu0 0.0
      %481 = vmatprep.subr.mxu0 0.0
      %482 = vmatpush1.msra.mxu0 0.0
      %483 = vmatprep.subr.mxu0 0.0
      %484 = vmatpush1.msra.mxu0 0.0
      %485 = vmatprep.subr.mxu0 0.0
      %486 = vmatpush1.msra.mxu0 0.0
      %487 = vmatprep.subr.mxu0 0.0
      %488 = vmatpush1.msra.mxu0 0.0
      %489 = vmatprep.subr.mxu0 0.0
      %490 = vmatpush1.msra.mxu0 0.0
      %491 = vmatprep.subr.mxu0 0.0
      %492 = vmatpush1.msra.mxu0 0.0
      %493 = vmatprep.subr.mxu0 0.0
      %494 = vmatpush1.msra.mxu0 0.0
      %495 = vmatprep.subr.mxu0 0.0
      %496 = vmatpush1.msra.mxu0 0.0
      %497 = vmatprep.subr.mxu0 0.0
      %498 = vmatpush1.msra.mxu0 0.0
      %499 = vmatprep.subr.mxu0 0.0
      %500 = vmatpush1.msra.mxu0 0.0
      %501 = vmatprep.subr.mxu0 0.0
      %502 = vmatpush1.msra.mxu0 0.0
      %503 = vmatprep.subr.mxu0 0.0
      %504 = vmatpush1.msra.mxu0 0.0
      %505 = vmatprep.subr.mxu0 0.0
      %506 = vmatpush1.msra.mxu0 0.0
      %507 = vmatprep.subr.mxu0 0.0
      %508 = vmatpush1.msra.mxu0 0.0
      %509 = vmatprep.subr.mxu0 0.0
      %510 = vmatpush1.msra.mxu0 0.0
      %511 = vmatprep.subr.mxu0 0.0
      %512 = vmatpush1.msra.mxu0 0.0
      %513 = vmatprep.mubr.f32.mxu0 0.0
      %514 = vmatmul.mubr.f32.gmra.mrb[0].mxu0 %v398
      %v515 = vpop.f32.mrb[0].mxu0
      %v516 = vadd.f32 0.0, %v515
      %v517 = vpop.f32.mrb[0].mxu0
      %518 = vmatprep.mubr.f32.mxu0 0.0
      %519 = vmatmul.mubr.f32.gmra.mrb[0].mxu0 %v401
      %v520 = vpop.f32.mrb[0].mxu0
      %v521 = vadd.f32 0.0, %v520
      %v522 = vpop.f32.mrb[0].mxu0
      %523 = vmatprep.mubr.f32.mxu0 0.0
      %524 = vmatmul.mubr.f32.gmra.mrb[0].mxu0 %v404
      %v525 = vpop.f32.mrb[0].mxu0
      %v526 = vadd.f32 0.0, %v525
      %v527 = vpop.f32.mrb[0].mxu0
      %528 = vmatprep.mubr.f32.mxu0 0.0
      %529 = vmatmul.mubr.f32.gmra.mrb[0].mxu0 %v407
      %v530 = vpop.f32.mrb[0].mxu0
      %v531 = vadd.f32 0.0, %v530
      %v532 = vpop.f32.mrb[0].mxu0
      %533 = vmatprep.mubr.f32.mxu0 0.0
      %534 = vmatmul.mubr.f32.gmra.mrb[0].mxu0 %v410
      %v535 = vpop.f32.mrb[0].mxu0
      %v536 = vadd.f32 0.0, %v535
      %v537 = vpop.f32.mrb[0].mxu0
      %538 = vmatprep.mubr.f32.mxu0 0.0
      %539 = vmatmul.mubr.f32.gmra.mrb[0].mxu0 %v413
      %v540 = vpop.f32.mrb[0].mxu0
      %v541 = vadd.f32 0.0, %v540
      %v542 = vpop.f32.mrb[0].mxu0
      %543 = vmatprep.mubr.f32.mxu0 0.0
      %544 = vmatmul.mubr.f32.gmra.mrb[0].mxu0 %v416
      %v545 = vpop.f32.mrb[0].mxu0
      %v546 = vadd.f32 0.0, %v545
      %v547 = vpop.f32.mrb[0].mxu0
      %548 = vmatprep.mubr.f32.mxu0 0.0
      %549 = vmatmul.mubr.f32.gmra.mrb[0].mxu0 %v419
      %v550 = vpop.f32.mrb[0].mxu0
      %v551 = vadd.f32 0.0, %v550
      %v552 = vpop.f32.mrb[0].mxu0
      %553 = vmatprep.mubr.f32.mxu0 0.0
      %554 = vmatmul.mubr.f32.gmra.mrb[0].mxu0 %v422
      %v555 = vpop.f32.mrb[0].mxu0
      %v556 = vadd.f32 0.0, %v555
      %v557 = vpop.f32.mrb[0].mxu0
      %558 = vmatprep.mubr.f32.mxu0 0.0
      %559 = vmatmul.mubr.f32.gmra.mrb[0].mxu0 %v425
      %v560 = vpop.f32.mrb[0].mxu0
      %v561 = vadd.f32 0.0, %v560
      %v562 = vpop.f32.mrb[0].mxu0
      %563 = vmatprep.mubr.f32.mxu0 0.0
      %564 = vmatmul.mubr.f32.gmra.mrb[0].mxu0 %v428
      %v565 = vpop.f32.mrb[0].mxu0
      %v566 = vadd.f32 0.0, %v565
      %v567 = vpop.f32.mrb[0].mxu0
      %568 = vmatprep.mubr.f32.mxu0 0.0
      %569 = vmatmul.mubr.f32.gmra.mrb[0].mxu0 %v431
      %v570 = vpop.f32.mrb[0].mxu0
      %v571 = vadd.f32 0.0, %v570
      %v572 = vpop.f32.mrb[0].mxu0
      %573 = vmatprep.mubr.f32.mxu0 0.0
      %574 = vmatmul.mubr.f32.gmra.mrb[0].mxu0 %v434
      %v575 = vpop.f32.mrb[0].mxu0
      %v576 = vadd.f32 0.0, %v575
      %v577 = vpop.f32.mrb[0].mxu0
      %578 = vmatprep.mubr.f32.mxu0 0.0
      %579 = vmatmul.mubr.f32.gmra.mrb[0].mxu0 %v437
      %v580 = vpop.f32.mrb[0].mxu0
      %v581 = vadd.f32 0.0, %v580
      %v582 = vpop.f32.mrb[0].mxu0
      %583 = vmatprep.mubr.f32.mxu0 0.0
      %584 = vmatmul.mubr.f32.gmra.mrb[0].mxu0 %v440
      %v585 = vpop.f32.mrb[0].mxu0
      %v586 = vadd.f32 0.0, %v585
      %v587 = vpop.f32.mrb[0].mxu0
      %588 = vmatprep.mubr.f32.mxu0 0.0
      %589 = vmatmul.mubr.f32.gmra.mrb[0].mxu0 %v443
      %v590 = vpop.f32.mrb[0].mxu0
      %v591 = vadd.f32 0.0, %v590
      %v592 = vpop.f32.mrb[0].mxu0
      %593 = vdwg.mxu0
      %v595 = vsel %vm396, %v332, 0
      %v598 = vsel %vm396, %v333, 0
      %v601 = vsel %vm396, %v334, 0
      %v604 = vsel %vm396, %v335, 0
      %v607 = vsel %vm396, %v336, 0
      %v610 = vsel %vm396, %v337, 0
      %v613 = vsel %vm396, %v338, 0
      %v616 = vsel %vm396, %v339, 0
      %v619 = vsel %vm396, %v340, 0
      %v622 = vsel %vm396, %v341, 0
      %v625 = vsel %vm396, %v342, 0
      %v628 = vsel %vm396, %v343, 0
      %v631 = vsel %vm396, %v344, 0
      %v634 = vsel %vm396, %v345, 0
      %v637 = vsel %vm396, %v346, 0
      %v640 = vsel %vm396, %v347, 0
      %v643 = vsel %vm445, %v299, 0
      %645 = vmatprep.subr.mxu0 0.0
      %646 = vmatpush1.msra.mxu0 %v298
      %647 = vmatprep.subr.mxu0 0.0
      %648 = vmatpush1.msra.mxu0 %v643
      %649 = vmatprep.subr.mxu0 0.0
      %650 = vmatpush1.msra.mxu0 0.0
      %651 = vmatprep.subr.mxu0 0.0
      %652 = vmatpush1.msra.mxu0 0.0
      %653 = vmatprep.subr.mxu0 0.0
      %654 = vmatpush1.msra.mxu0 0.0
      %655 = vmatprep.subr.mxu0 0.0
      %656 = vmatpush1.msra.mxu0 0.0
      %657 = vmatprep.subr.mxu0 0.0
      %658 = vmatpush1.msra.mxu0 0.0
      %659 = vmatprep.subr.mxu0 0.0
      %660 = vmatpush1.msra.mxu0 0.0
      %661 = vmatprep.subr.mxu0 0.0
      %662 = vmatpush1.msra.mxu0 0.0
      %663 = vmatprep.subr.mxu0 0.0
      %664 = vmatpush1.msra.mxu0 0.0
      %665 = vmatprep.subr.mxu0 0.0
      %666 = vmatpush1.msra.mxu0 0.0
      %667 = vmatprep.subr.mxu0 0.0
      %668 = vmatpush1.msra.mxu0 0.0
      %669 = vmatprep.subr.mxu0 0.0
      %670 = vmatpush1.msra.mxu0 0.0
      %671 = vmatprep.subr.mxu0 0.0
      %672 = vmatpush1.msra.mxu0 0.0
      %673 = vmatprep.subr.mxu0 0.0
      %674 = vmatpush1.msra.mxu0 0.0
      %675 = vmatprep.subr.mxu0 0.0
      %676 = vmatpush1.msra.mxu0 0.0
      %677 = vmatprep.subr.mxu0 0.0
      %678 = vmatpush1.msra.mxu0 0.0
      %679 = vmatprep.subr.mxu0 0.0
      %680 = vmatpush1.msra.mxu0 0.0
      %681 = vmatprep.subr.mxu0 0.0
      %682 = vmatpush1.msra.mxu0 0.0
      %683 = vmatprep.subr.mxu0 0.0
      %684 = vmatpush1.msra.mxu0 0.0
      %685 = vmatprep.subr.mxu0 0.0
      %686 = vmatpush1.msra.mxu0 0.0
      %687 = vmatprep.subr.mxu0 0.0
      %688 = vmatpush1.msra.mxu0 0.0
      %689 = vmatprep.subr.mxu0 0.0
      %690 = vmatpush1.msra.mxu0 0.0
      %691 = vmatprep.subr.mxu0 0.0
      %692 = vmatpush1.msra.mxu0 0.0
      %693 = vmatprep.subr.mxu0 0.0
      %694 = vmatpush1.msra.mxu0 0.0
      %695 = vmatprep.subr.mxu0 0.0
      %696 = vmatpush1.msra.mxu0 0.0
      %697 = vmatprep.subr.mxu0 0.0
      %698 = vmatpush1.msra.mxu0 0.0
      %699 = vmatprep.subr.mxu0 0.0
      %700 = vmatpush1.msra.mxu0 0.0
      %701 = vmatprep.subr.mxu0 0.0
      %702 = vmatpush1.msra.mxu0 0.0
      %703 = vmatprep.subr.mxu0 0.0
      %704 = vmatpush1.msra.mxu0 0.0
      %705 = vmatprep.subr.mxu0 0.0
      %706 = vmatpush1.msra.mxu0 0.0
      %707 = vmatprep.subr.mxu0 0.0
      %708 = vmatpush1.msra.mxu0 0.0
      %709 = vmatprep.mubr.f32.mxu0 0.0
      %710 = vmatmul.mubr.f32.gmra.mrb[0].mxu0 %v595
      %v711 = vpop.f32.mrb[0].mxu0
      %v712 = vadd.f32 0.0, %v711
      %v713 = vpop.f32.mrb[0].mxu0
      %714 = vmatprep.mubr.f32.mxu0 0.0
      %715 = vmatmul.mubr.f32.gmra.mrb[0].mxu0 %v598
      %v716 = vpop.f32.mrb[0].mxu0
      %v717 = vadd.f32 0.0, %v716
      %v718 = vpop.f32.mrb[0].mxu0
      %719 = vmatprep.mubr.f32.mxu0 0.0
      %720 = vmatmul.mubr.f32.gmra.mrb[0].mxu0 %v601
      %v721 = vpop.f32.mrb[0].mxu0
      %v722 = vadd.f32 0.0, %v721
      %v723 = vpop.f32.mrb[0].mxu0
      %724 = vmatprep.mubr.f32.mxu0 0.0
      %725 = vmatmul.mubr.f32.gmra.mrb[0].mxu0 %v604
      %v726 = vpop.f32.mrb[0].mxu0
      %v727 = vadd.f32 0.0, %v726
      %v728 = vpop.f32.mrb[0].mxu0
      %729 = vmatprep.mubr.f32.mxu0 0.0
      %730 = vmatmul.mubr.f32.gmra.mrb[0].mxu0 %v607
      %v731 = vpop.f32.mrb[0].mxu0
      %v732 = vadd.f32 0.0, %v731
      %v733 = vpop.f32.mrb[0].mxu0
      %734 = vmatprep.mubr.f32.mxu0 0.0
      %735 = vmatmul.mubr.f32.gmra.mrb[0].mxu0 %v610
      %v736 = vpop.f32.mrb[0].mxu0
      %v737 = vadd.f32 0.0, %v736
      %v738 = vpop.f32.mrb[0].mxu0
      %739 = vmatprep.mubr.f32.mxu0 0.0
      %740 = vmatmul.mubr.f32.gmra.mrb[0].mxu0 %v613
      %v741 = vpop.f32.mrb[0].mxu0
      %v742 = vadd.f32 0.0, %v741
      %v743 = vpop.f32.mrb[0].mxu0
      %744 = vmatprep.mubr.f32.mxu0 0.0
      %745 = vmatmul.mubr.f32.gmra.mrb[0].mxu0 %v616
      %v746 = vpop.f32.mrb[0].mxu0
      %v747 = vadd.f32 0.0, %v746
      %v748 = vpop.f32.mrb[0].mxu0
      %749 = vmatprep.mubr.f32.mxu0 0.0
      %750 = vmatmul.mubr.f32.gmra.mrb[0].mxu0 %v619
      %v751 = vpop.f32.mrb[0].mxu0
      %v752 = vadd.f32 0.0, %v751
      %v753 = vpop.f32.mrb[0].mxu0
      %754 = vmatprep.mubr.f32.mxu0 0.0
      %755 = vmatmul.mubr.f32.gmra.mrb[0].mxu0 %v622
      %v756 = vpop.f32.mrb[0].mxu0
      %v757 = vadd.f32 0.0, %v756
      %v758 = vpop.f32.mrb[0].mxu0
      %759 = vmatprep.mubr.f32.mxu0 0.0
      %760 = vmatmul.mubr.f32.gmra.mrb[0].mxu0 %v625
      %v761 = vpop.f32.mrb[0].mxu0
      %v762 = vadd.f32 0.0, %v761
      %v763 = vpop.f32.mrb[0].mxu0
      %764 = vmatprep.mubr.f32.mxu0 0.0
      %765 = vmatmul.mubr.f32.gmra.mrb[0].mxu0 %v628
      %v766 = vpop.f32.mrb[0].mxu0
      %v767 = vadd.f32 0.0, %v766
      %v768 = vpop.f32.mrb[0].mxu0
      %769 = vmatprep.mubr.f32.mxu0 0.0
      %770 = vmatmul.mubr.f32.gmra.mrb[0].mxu0 %v631
      %v771 = vpop.f32.mrb[0].mxu0
      %v772 = vadd.f32 0.0, %v771
      %v773 = vpop.f32.mrb[0].mxu0
      %774 = vmatprep.mubr.f32.mxu0 0.0
      %775 = vmatmul.mubr.f32.gmra.mrb[0].mxu0 %v634
      %v776 = vpop.f32.mrb[0].mxu0
      %v777 = vadd.f32 0.0, %v776
      %v778 = vpop.f32.mrb[0].mxu0
      %779 = vmatprep.mubr.f32.mxu0 0.0
      %780 = vmatmul.mubr.f32.gmra.mrb[0].mxu0 %v637
      %v781 = vpop.f32.mrb[0].mxu0
      %v782 = vadd.f32 0.0, %v781
      %v783 = vpop.f32.mrb[0].mxu0
      %784 = vmatprep.mubr.f32.mxu0 0.0
      %785 = vmatmul.mubr.f32.gmra.mrb[0].mxu0 %v640
      %v786 = vpop.f32.mrb[0].mxu0
      %v787 = vadd.f32 0.0, %v786
      %v788 = vpop.f32.mrb[0].mxu0
      %789 = vdwg.mxu0
      %v790 = vsub.f32 %v516, %v712
      %v791 = vsub.f32 %v521, %v717
      %v792 = vsub.f32 %v526, %v722
      %v793 = vsub.f32 %v531, %v727
      %v794 = vsub.f32 %v536, %v732
      %v795 = vsub.f32 %v541, %v737
      %v796 = vsub.f32 %v546, %v742
      %v797 = vsub.f32 %v551, %v747
      %v798 = vsub.f32 %v556, %v752
      %v799 = vsub.f32 %v561, %v757
      %v800 = vsub.f32 %v566, %v762
      %v801 = vsub.f32 %v571, %v767
      %v802 = vsub.f32 %v576, %v772
      %v803 = vsub.f32 %v581, %v777
      %v804 = vsub.f32 %v586, %v782
      %v805 = vsub.f32 %v591, %v787
      %vm806 = vcmask 89088
      %807 = vst.msk [vmem:[%s256] sm:$0xff] %vm806, %v790
      %808 = vst.msk [vmem:[%s256 + $0x8] sm:$0xff] %vm806, %v791
      %809 = vst.msk [vmem:[%s256 + $0x10] sm:$0xff] %vm806, %v792
      %810 = vst.msk [vmem:[%s256 + $0x18] sm:$0xff] %vm806, %v793
      %811 = vst.msk [vmem:[%s256 + $0x20] sm:$0xff] %vm806, %v794
      %812 = vst.msk [vmem:[%s256 + $0x28] sm:$0xff] %vm806, %v795
      %813 = vst.msk [vmem:[%s256 + $0x30] sm:$0xff] %vm806, %v796
      %814 = vst.msk [vmem:[%s256 + $0x38] sm:$0xff] %vm806, %v797
      %815 = vst.msk [vmem:[%s256 + $0x40] sm:$0xff] %vm806, %v798
      %816 = vst.msk [vmem:[%s256 + $0x48] sm:$0xff] %vm806, %v799
      %817 = vst.msk [vmem:[%s256 + $0x50] sm:$0xff] %vm806, %v800
      %818 = vst.msk [vmem:[%s256 + $0x58] sm:$0xff] %vm806, %v801
      %819 = vst.msk [vmem:[%s256 + $0x60] sm:$0xff] %vm806, %v802
      %820 = vst.msk [vmem:[%s256 + $0x68] sm:$0xff] %vm806, %v803
      %821 = vst.msk [vmem:[%s256 + $0x70] sm:$0xff] %vm806, %v804
      %822 = vst.msk [vmem:[%s256 + $0x78] sm:$0xff] %vm806, %v805
      %v824 = vsel %vm396, %v348, 0
      %v827 = vsel %vm396, %v349, 0
      %v830 = vsel %vm396, %v350, 0
      %v833 = vsel %vm396, %v351, 0
      %v836 = vsel %vm396, %v352, 0
      %v839 = vsel %vm396, %v353, 0
      %v842 = vsel %vm396, %v354, 0
      %v845 = vsel %vm396, %v355, 0
      %v848 = vsel %vm396, %v356, 0
      %v851 = vsel %vm396, %v357, 0
      %v854 = vsel %vm396, %v358, 0
      %v857 = vsel %vm396, %v359, 0
      %v860 = vsel %vm396, %v360, 0
      %v863 = vsel %vm396, %v361, 0
      %v866 = vsel %vm396, %v362, 0
      %v869 = vsel %vm396, %v363, 0
      %871 = vmatprep.subr.mxu0 0.0
      %872 = vmatpush1.msra.mxu0 %v298
      %873 = vmatprep.subr.mxu0 0.0
      %874 = vmatpush1.msra.mxu0 %v643
      %875 = vmatprep.subr.mxu0 0.0
      %876 = vmatpush1.msra.mxu0 0.0
      %877 = vmatprep.subr.mxu0 0.0
      %878 = vmatpush1.msra.mxu0 0.0
      %879 = vmatprep.subr.mxu0 0.0
      %880 = vmatpush1.msra.mxu0 0.0
      %881 = vmatprep.subr.mxu0 0.0
      %882 = vmatpush1.msra.mxu0 0.0
      %883 = vmatprep.subr.mxu0 0.0
      %884 = vmatpush1.msra.mxu0 0.0
      %885 = vmatprep.subr.mxu0 0.0
      %886 = vmatpush1.msra.mxu0 0.0
      %887 = vmatprep.subr.mxu0 0.0
      %888 = vmatpush1.msra.mxu0 0.0
      %889 = vmatprep.subr.mxu0 0.0
      %890 = vmatpush1.msra.mxu0 0.0
      %891 = vmatprep.subr.mxu0 0.0
      %892 = vmatpush1.msra.mxu0 0.0
      %893 = vmatprep.subr.mxu0 0.0
      %894 = vmatpush1.msra.mxu0 0.0
      %895 = vmatprep.subr.mxu0 0.0
      %896 = vmatpush1.msra.mxu0 0.0
      %897 = vmatprep.subr.mxu0 0.0
      %898 = vmatpush1.msra.mxu0 0.0
      %899 = vmatprep.subr.mxu0 0.0
      %900 = vmatpush1.msra.mxu0 0.0
      %901 = vmatprep.subr.mxu0 0.0
      %902 = vmatpush1.msra.mxu0 0.0
      %903 = vmatprep.subr.mxu0 0.0
      %904 = vmatpush1.msra.mxu0 0.0
      %905 = vmatprep.subr.mxu0 0.0
      %906 = vmatpush1.msra.mxu0 0.0
      %907 = vmatprep.subr.mxu0 0.0
      %908 = vmatpush1.msra.mxu0 0.0
      %909 = vmatprep.subr.mxu0 0.0
      %910 = vmatpush1.msra.mxu0 0.0
      %911 = vmatprep.subr.mxu0 0.0
      %912 = vmatpush1.msra.mxu0 0.0
      %913 = vmatprep.subr.mxu0 0.0
      %914 = vmatpush1.msra.mxu0 0.0
      %915 = vmatprep.subr.mxu0 0.0
      %916 = vmatpush1.msra.mxu0 0.0
      %917 = vmatprep.subr.mxu0 0.0
      %918 = vmatpush1.msra.mxu0 0.0
      %919 = vmatprep.subr.mxu0 0.0
      %920 = vmatpush1.msra.mxu0 0.0
      %921 = vmatprep.subr.mxu0 0.0
      %922 = vmatpush1.msra.mxu0 0.0
      %923 = vmatprep.subr.mxu0 0.0
      %924 = vmatpush1.msra.mxu0 0.0
      %925 = vmatprep.subr.mxu0 0.0
      %926 = vmatpush1.msra.mxu0 0.0
      %927 = vmatprep.subr.mxu0 0.0
      %928 = vmatpush1.msra.mxu0 0.0
      %929 = vmatprep.subr.mxu0 0.0
      %930 = vmatpush1.msra.mxu0 0.0
      %931 = vmatprep.subr.mxu0 0.0
      %932 = vmatpush1.msra.mxu0 0.0
      %933 = vmatprep.subr.mxu0 0.0
      %934 = vmatpush1.msra.mxu0 0.0
      %935 = vmatprep.mubr.f32.mxu0 0.0
      %936 = vmatmul.mubr.f32.gmra.mrb[0].mxu0 %v824
      %v937 = vpop.f32.mrb[0].mxu0
      %v938 = vadd.f32 0.0, %v937
      %v939 = vpop.f32.mrb[0].mxu0
      %940 = vmatprep.mubr.f32.mxu0 0.0
      %941 = vmatmul.mubr.f32.gmra.mrb[0].mxu0 %v827
      %v942 = vpop.f32.mrb[0].mxu0
      %v943 = vadd.f32 0.0, %v942
      %v944 = vpop.f32.mrb[0].mxu0
      %945 = vmatprep.mubr.f32.mxu0 0.0
      %946 = vmatmul.mubr.f32.gmra.mrb[0].mxu0 %v830
      %v947 = vpop.f32.mrb[0].mxu0
      %v948 = vadd.f32 0.0, %v947
      %v949 = vpop.f32.mrb[0].mxu0
      %950 = vmatprep.mubr.f32.mxu0 0.0
      %951 = vmatmul.mubr.f32.gmra.mrb[0].mxu0 %v833
      %v952 = vpop.f32.mrb[0].mxu0
      %v953 = vadd.f32 0.0, %v952
      %v954 = vpop.f32.mrb[0].mxu0
      %955 = vmatprep.mubr.f32.mxu0 0.0
      %956 = vmatmul.mubr.f32.gmra.mrb[0].mxu0 %v836
      %v957 = vpop.f32.mrb[0].mxu0
      %v958 = vadd.f32 0.0, %v957
      %v959 = vpop.f32.mrb[0].mxu0
      %960 = vmatprep.mubr.f32.mxu0 0.0
      %961 = vmatmul.mubr.f32.gmra.mrb[0].mxu0 %v839
      %v962 = vpop.f32.mrb[0].mxu0
      %v963 = vadd.f32 0.0, %v962
      %v964 = vpop.f32.mrb[0].mxu0
      %965 = vmatprep.mubr.f32.mxu0 0.0
      %966 = vmatmul.mubr.f32.gmra.mrb[0].mxu0 %v842
      %v967 = vpop.f32.mrb[0].mxu0
      %v968 = vadd.f32 0.0, %v967
      %v969 = vpop.f32.mrb[0].mxu0
      %970 = vmatprep.mubr.f32.mxu0 0.0
      %971 = vmatmul.mubr.f32.gmra.mrb[0].mxu0 %v845
      %v972 = vpop.f32.mrb[0].mxu0
      %v973 = vadd.f32 0.0, %v972
      %v974 = vpop.f32.mrb[0].mxu0
      %975 = vmatprep.mubr.f32.mxu0 0.0
      %976 = vmatmul.mubr.f32.gmra.mrb[0].mxu0 %v848
      %v977 = vpop.f32.mrb[0].mxu0
      %v978 = vadd.f32 0.0, %v977
      %v979 = vpop.f32.mrb[0].mxu0
      %980 = vmatprep.mubr.f32.mxu0 0.0
      %981 = vmatmul.mubr.f32.gmra.mrb[0].mxu0 %v851
      %v982 = vpop.f32.mrb[0].mxu0
      %v983 = vadd.f32 0.0, %v982
      %v984 = vpop.f32.mrb[0].mxu0
      %985 = vmatprep.mubr.f32.mxu0 0.0
      %986 = vmatmul.mubr.f32.gmra.mrb[0].mxu0 %v854
      %v987 = vpop.f32.mrb[0].mxu0
      %v988 = vadd.f32 0.0, %v987
      %v989 = vpop.f32.mrb[0].mxu0
      %990 = vmatprep.mubr.f32.mxu0 0.0
      %991 = vmatmul.mubr.f32.gmra.mrb[0].mxu0 %v857
      %v992 = vpop.f32.mrb[0].mxu0
      %v993 = vadd.f32 0.0, %v992
      %v994 = vpop.f32.mrb[0].mxu0
      %995 = vmatprep.mubr.f32.mxu0 0.0
      %996 = vmatmul.mubr.f32.gmra.mrb[0].mxu0 %v860
      %v997 = vpop.f32.mrb[0].mxu0
      %v998 = vadd.f32 0.0, %v997
      %v999 = vpop.f32.mrb[0].mxu0
      %1000 = vmatprep.mubr.f32.mxu0 0.0
      %1001 = vmatmul.mubr.f32.gmra.mrb[0].mxu0 %v863
      %v1002 = vpop.f32.mrb[0].mxu0
      %v1003 = vadd.f32 0.0, %v1002
      %v1004 = vpop.f32.mrb[0].mxu0
      %1005 = vmatprep.mubr.f32.mxu0 0.0
      %1006 = vmatmul.mubr.f32.gmra.mrb[0].mxu0 %v866
      %v1007 = vpop.f32.mrb[0].mxu0
      %v1008 = vadd.f32 0.0, %v1007
      %v1009 = vpop.f32.mrb[0].mxu0
      %1010 = vmatprep.mubr.f32.mxu0 0.0
      %1011 = vmatmul.mubr.f32.gmra.mrb[0].mxu0 %v869
      %v1012 = vpop.f32.mrb[0].mxu0
      %v1013 = vadd.f32 0.0, %v1012
      %v1014 = vpop.f32.mrb[0].mxu0
      %1015 = vdwg.mxu0
      %v1017 = vsel %vm396, %v380, 0
      %v1020 = vsel %vm396, %v381, 0
      %v1023 = vsel %vm396, %v382, 0
      %v1026 = vsel %vm396, %v383, 0
      %v1029 = vsel %vm396, %v384, 0
      %v1032 = vsel %vm396, %v385, 0
      %v1035 = vsel %vm396, %v386, 0
      %v1038 = vsel %vm396, %v387, 0
      %v1041 = vsel %vm396, %v388, 0
      %v1044 = vsel %vm396, %v389, 0
      %v1047 = vsel %vm396, %v390, 0
      %v1050 = vsel %vm396, %v391, 0
      %v1053 = vsel %vm396, %v392, 0
      %v1056 = vsel %vm396, %v393, 0
      %v1059 = vsel %vm396, %v394, 0
      %v1062 = vsel %vm396, %v395, 0
      %1064 = vmatprep.subr.mxu0 0.0
      %1065 = vmatpush1.msra.mxu0 %v296
      %1066 = vmatprep.subr.mxu0 0.0
      %1067 = vmatpush1.msra.mxu0 %v447
      %1068 = vmatprep.subr.mxu0 0.0
      %1069 = vmatpush1.msra.mxu0 0.0
      %1070 = vmatprep.subr.mxu0 0.0
      %1071 = vmatpush1.msra.mxu0 0.0
      %1072 = vmatprep.subr.mxu0 0.0
      %1073 = vmatpush1.msra.mxu0 0.0
      %1074 = vmatprep.subr.mxu0 0.0
      %1075 = vmatpush1.msra.mxu0 0.0
      %1076 = vmatprep.subr.mxu0 0.0
      %1077 = vmatpush1.msra.mxu0 0.0
      %1078 = vmatprep.subr.mxu0 0.0
      %1079 = vmatpush1.msra.mxu0 0.0
      %1080 = vmatprep.subr.mxu0 0.0
      %1081 = vmatpush1.msra.mxu0 0.0
      %1082 = vmatprep.subr.mxu0 0.0
      %1083 = vmatpush1.msra.mxu0 0.0
      %1084 = vmatprep.subr.mxu0 0.0
      %1085 = vmatpush1.msra.mxu0 0.0
      %1086 = vmatprep.subr.mxu0 0.0
      %1087 = vmatpush1.msra.mxu0 0.0
      %1088 = vmatprep.subr.mxu0 0.0
      %1089 = vmatpush1.msra.mxu0 0.0
      %1090 = vmatprep.subr.mxu0 0.0
      %1091 = vmatpush1.msra.mxu0 0.0
      %1092 = vmatprep.subr.mxu0 0.0
      %1093 = vmatpush1.msra.mxu0 0.0
      %1094 = vmatprep.subr.mxu0 0.0
      %1095 = vmatpush1.msra.mxu0 0.0
      %1096 = vmatprep.subr.mxu0 0.0
      %1097 = vmatpush1.msra.mxu0 0.0
      %1098 = vmatprep.subr.mxu0 0.0
      %1099 = vmatpush1.msra.mxu0 0.0
      %1100 = vmatprep.subr.mxu0 0.0
      %1101 = vmatpush1.msra.mxu0 0.0
      %1102 = vmatprep.subr.mxu0 0.0
      %1103 = vmatpush1.msra.mxu0 0.0
      %1104 = vmatprep.subr.mxu0 0.0
      %1105 = vmatpush1.msra.mxu0 0.0
      %1106 = vmatprep.subr.mxu0 0.0
      %1107 = vmatpush1.msra.mxu0 0.0
      %1108 = vmatprep.subr.mxu0 0.0
      %1109 = vmatpush1.msra.mxu0 0.0
      %1110 = vmatprep.subr.mxu0 0.0
      %1111 = vmatpush1.msra.mxu0 0.0
      %1112 = vmatprep.subr.mxu0 0.0
      %1113 = vmatpush1.msra.mxu0 0.0
      %1114 = vmatprep.subr.mxu0 0.0
      %1115 = vmatpush1.msra.mxu0 0.0
      %1116 = vmatprep.subr.mxu0 0.0
      %1117 = vmatpush1.msra.mxu0 0.0
      %1118 = vmatprep.subr.mxu0 0.0
      %1119 = vmatpush1.msra.mxu0 0.0
      %1120 = vmatprep.subr.mxu0 0.0
      %1121 = vmatpush1.msra.mxu0 0.0
      %1122 = vmatprep.subr.mxu0 0.0
      %1123 = vmatpush1.msra.mxu0 0.0
      %1124 = vmatprep.subr.mxu0 0.0
      %1125 = vmatpush1.msra.mxu0 0.0
      %1126 = vmatprep.subr.mxu0 0.0
      %1127 = vmatpush1.msra.mxu0 0.0
      %1128 = vmatprep.mubr.f32.mxu0 0.0
      %1129 = vmatmul.mubr.f32.gmra.mrb[0].mxu0 %v1017
      %v1130 = vpop.f32.mrb[0].mxu0
      %v1131 = vadd.f32 0.0, %v1130
      %v1132 = vpop.f32.mrb[0].mxu0
      %1133 = vmatprep.mubr.f32.mxu0 0.0
      %1134 = vmatmul.mubr.f32.gmra.mrb[0].mxu0 %v1020
      %v1135 = vpop.f32.mrb[0].mxu0
      %v1136 = vadd.f32 0.0, %v1135
      %v1137 = vpop.f32.mrb[0].mxu0
      %1138 = vmatprep.mubr.f32.mxu0 0.0
      %1139 = vmatmul.mubr.f32.gmra.mrb[0].mxu0 %v1023
      %v1140 = vpop.f32.mrb[0].mxu0
      %v1141 = vadd.f32 0.0, %v1140
      %v1142 = vpop.f32.mrb[0].mxu0
      %1143 = vmatprep.mubr.f32.mxu0 0.0
      %1144 = vmatmul.mubr.f32.gmra.mrb[0].mxu0 %v1026
      %v1145 = vpop.f32.mrb[0].mxu0
      %v1146 = vadd.f32 0.0, %v1145
      %v1147 = vpop.f32.mrb[0].mxu0
      %1148 = vmatprep.mubr.f32.mxu0 0.0
      %1149 = vmatmul.mubr.f32.gmra.mrb[0].mxu0 %v1029
      %v1150 = vpop.f32.mrb[0].mxu0
      %v1151 = vadd.f32 0.0, %v1150
      %v1152 = vpop.f32.mrb[0].mxu0
      %1153 = vmatprep.mubr.f32.mxu0 0.0
      %1154 = vmatmul.mubr.f32.gmra.mrb[0].mxu0 %v1032
      %v1155 = vpop.f32.mrb[0].mxu0
      %v1156 = vadd.f32 0.0, %v1155
      %v1157 = vpop.f32.mrb[0].mxu0
      %1158 = vmatprep.mubr.f32.mxu0 0.0
      %1159 = vmatmul.mubr.f32.gmra.mrb[0].mxu0 %v1035
      %v1160 = vpop.f32.mrb[0].mxu0
      %v1161 = vadd.f32 0.0, %v1160
      %v1162 = vpop.f32.mrb[0].mxu0
      %1163 = vmatprep.mubr.f32.mxu0 0.0
      %1164 = vmatmul.mubr.f32.gmra.mrb[0].mxu0 %v1038
      %v1165 = vpop.f32.mrb[0].mxu0
      %v1166 = vadd.f32 0.0, %v1165
      %v1167 = vpop.f32.mrb[0].mxu0
      %1168 = vmatprep.mubr.f32.mxu0 0.0
      %1169 = vmatmul.mubr.f32.gmra.mrb[0].mxu0 %v1041
      %v1170 = vpop.f32.mrb[0].mxu0
      %v1171 = vadd.f32 0.0, %v1170
      %v1172 = vpop.f32.mrb[0].mxu0
      %1173 = vmatprep.mubr.f32.mxu0 0.0
      %1174 = vmatmul.mubr.f32.gmra.mrb[0].mxu0 %v1044
      %v1175 = vpop.f32.mrb[0].mxu0
      %v1176 = vadd.f32 0.0, %v1175
      %v1177 = vpop.f32.mrb[0].mxu0
      %1178 = vmatprep.mubr.f32.mxu0 0.0
      %1179 = vmatmul.mubr.f32.gmra.mrb[0].mxu0 %v1047
      %v1180 = vpop.f32.mrb[0].mxu0
      %v1181 = vadd.f32 0.0, %v1180
      %v1182 = vpop.f32.mrb[0].mxu0
      %1183 = vmatprep.mubr.f32.mxu0 0.0
      %1184 = vmatmul.mubr.f32.gmra.mrb[0].mxu0 %v1050
      %v1185 = vpop.f32.mrb[0].mxu0
      %v1186 = vadd.f32 0.0, %v1185
      %v1187 = vpop.f32.mrb[0].mxu0
      %1188 = vmatprep.mubr.f32.mxu0 0.0
      %1189 = vmatmul.mubr.f32.gmra.mrb[0].mxu0 %v1053
      %v1190 = vpop.f32.mrb[0].mxu0
      %v1191 = vadd.f32 0.0, %v1190
      %v1192 = vpop.f32.mrb[0].mxu0
      %1193 = vmatprep.mubr.f32.mxu0 0.0
      %1194 = vmatmul.mubr.f32.gmra.mrb[0].mxu0 %v1056
      %v1195 = vpop.f32.mrb[0].mxu0
      %v1196 = vadd.f32 0.0, %v1195
      %v1197 = vpop.f32.mrb[0].mxu0
      %1198 = vmatprep.mubr.f32.mxu0 0.0
      %1199 = vmatmul.mubr.f32.gmra.mrb[0].mxu0 %v1059
      %v1200 = vpop.f32.mrb[0].mxu0
      %v1201 = vadd.f32 0.0, %v1200
      %v1202 = vpop.f32.mrb[0].mxu0
      %1203 = vmatprep.mubr.f32.mxu0 0.0
      %1204 = vmatmul.mubr.f32.gmra.mrb[0].mxu0 %v1062
      %v1205 = vpop.f32.mrb[0].mxu0
      %v1206 = vadd.f32 0.0, %v1205
      %v1207 = vpop.f32.mrb[0].mxu0
      %1208 = vdwg.mxu0
      %v1209 = vsub.f32 %v938, %v1131
      %v1210 = vsub.f32 %v943, %v1136
      %v1211 = vsub.f32 %v948, %v1141
      %v1212 = vsub.f32 %v953, %v1146
      %v1213 = vsub.f32 %v958, %v1151
      %v1214 = vsub.f32 %v963, %v1156
      %v1215 = vsub.f32 %v968, %v1161
      %v1216 = vsub.f32 %v973, %v1166
      %v1217 = vsub.f32 %v978, %v1171
      %v1218 = vsub.f32 %v983, %v1176
      %v1219 = vsub.f32 %v988, %v1181
      %v1220 = vsub.f32 %v993, %v1186
      %v1221 = vsub.f32 %v998, %v1191
      %v1222 = vsub.f32 %v1003, %v1196
      %v1223 = vsub.f32 %v1008, %v1201
      %v1224 = vsub.f32 %v1013, %v1206
      %1225 = vst.msk [vmem:[%s262] sm:$0xff] %vm806, %v1209
      %1226 = vst.msk [vmem:[%s262 + $0x8] sm:$0xff] %vm806, %v1210
      %1227 = vst.msk [vmem:[%s262 + $0x10] sm:$0xff] %vm806, %v1211
      %1228 = vst.msk [vmem:[%s262 + $0x18] sm:$0xff] %vm806, %v1212
      %1229 = vst.msk [vmem:[%s262 + $0x20] sm:$0xff] %vm806, %v1213
      %1230 = vst.msk [vmem:[%s262 + $0x28] sm:$0xff] %vm806, %v1214
      %1231 = vst.msk [vmem:[%s262 + $0x30] sm:$0xff] %vm806, %v1215
      %1232 = vst.msk [vmem:[%s262 + $0x38] sm:$0xff] %vm806, %v1216
      %1233 = vst.msk [vmem:[%s262 + $0x40] sm:$0xff] %vm806, %v1217
      %1234 = vst.msk [vmem:[%s262 + $0x48] sm:$0xff] %vm806, %v1218
      %1235 = vst.msk [vmem:[%s262 + $0x50] sm:$0xff] %vm806, %v1219
      %1236 = vst.msk [vmem:[%s262 + $0x58] sm:$0xff] %vm806, %v1220
      %1237 = vst.msk [vmem:[%s262 + $0x60] sm:$0xff] %vm806, %v1221
      %1238 = vst.msk [vmem:[%s262 + $0x68] sm:$0xff] %vm806, %v1222
      %1239 = vst.msk [vmem:[%s262 + $0x70] sm:$0xff] %vm806, %v1223
      %1240 = vst.msk [vmem:[%s262 + $0x78] sm:$0xff] %vm806, %v1224
      %s1241 = smul.u32 16, %s17
      %p1242 = scmp.lt.s32.totalorder %s1241, 31
      %s1243 = scalar_select %p1242, %s1241, 31
      %s1244 = smul.addr %s1243, 8
      %s1245 = scalar_lea.vmem %s4, %s1244
      %s1246 = smul.u32 16, %s17
      %p1247 = scmp.lt.s32.totalorder %s1246, 31
      %s1248 = scalar_select %p1247, %s1246, 31
      %s1249 = smul.addr %s1248, 8
      %s1250 = scalar_lea.vmem %s5, %s1249
      // Predicated region
      $region37: #{backsub_pallas.1} parent=35 // pred_check
        %p1251 = pneg %p129
      $region38: #{backsub_pallas.1} parent=35 // pred_check_branch
        %1253 = sbr.rel (%p1251) target = $region40
      $region39: #{backsub_pallas.1} parent=35 // pred_region
        %s1254 = smul.u32 16, %s17
      $region40: #{backsub_pallas.1} parent=35 // pred_fallthru
        _
      // Predicated region
      $region41: #{backsub_pallas.1} parent=35 // pred_check
        %p1255 = pneg %p155
      $region42: #{backsub_pallas.1} parent=35 // pred_check_branch
        %1257 = sbr.rel (%p1255) target = $region44
      $region43: #{backsub_pallas.1} parent=35 // pred_region
        %s1258 = smul.u32 16, %s17
      $region44: #{backsub_pallas.1} parent=35 // pred_fallthru
        _
    $region36: #{backsub_pallas.1} parent=5 // pred_fallthru
      _
    %p1259 = scmp.le.s32.totalorder 2, %s12
    // Predicated region
    $region45: #{backsub_pallas.1} parent=5 // pred_check
      %p1260 = pneg %p1259
    $region46: #{backsub_pallas.1} parent=5 // pred_check_branch
      %1262 = sbr.rel (%p1260) target = $region48
    $region47: #{backsub_pallas.1} parent=5 // pred_region
      %s1263 = ssub.s32 %s12, 2
      // Predicated region
      $region49: #{backsub_pallas.1} parent=47 // pred_check
        %p1264 = pneg %p135
      $region50: #{backsub_pallas.1} parent=47 // pred_check_branch
        %1266 = sbr.rel (%p1264) target = $region52
      $region51: #{backsub_pallas.1} parent=47 // pred_region
        %s1267 = smul.u32 16, %s18
        %p1268 = scmp.lt.s32.totalorder %s1267, 31
        %s1269 = scalar_select %p1268, %s1267, 31
        %s1270 = smul.addr %s1269, 8
        %s1271 = scalar_lea.vmem %s4, %s1270
      $region52: #{backsub_pallas.1} parent=47 // pred_fallthru
        _
      // Predicated region
      $region53: #{backsub_pallas.1} parent=47 // pred_check
        %p1272 = pneg %p161
      $region54: #{backsub_pallas.1} parent=47 // pred_check_branch
        %1274 = sbr.rel (%p1272) target = $region56
      $region55: #{backsub_pallas.1} parent=47 // pred_region
        %s1275 = smul.u32 16, %s18
        %p1276 = scmp.lt.s32.totalorder %s1275, 31
        %s1277 = scalar_select %p1276, %s1275, 31
        %s1278 = smul.addr %s1277, 8
        %s1279 = scalar_lea.vmem %s5, %s1278
      $region56: #{backsub_pallas.1} parent=47 // pred_fallthru
        _
    $region48: #{backsub_pallas.1} parent=5 // pred_fallthru
      _
  $region6: #{backsub_pallas.1} parent=0 // loop_footer
    %s16 = sadd.s32 1, %s12
  $region7: #{backsub_pallas.1} parent=0 // loop_footer_branch
    %11 = sbr.rel target = $region3
  $region8: #{backsub_pallas.1} parent=0 // loop_exit
    _

</llo_original>
